<compile_context>
chip_gen: v5e
topology: v5e:2x2
jax: 0.10.0
libtpu: 0.0.40
codegen_flags: <defaults>
</compile_context>

<pallas_src>
import functools

import jax
import jax.numpy as jnp
from jax.experimental import pallas as pl
from jax.experimental.pallas import tpu as pltpu


# ---------------------------------------------------------------------------
# Kernels
# ---------------------------------------------------------------------------

def _ln_kernel(x_ref, a_ref, b_ref, o_ref, *, eps):
    """Row-wise LayerNorm on a [TILE_R, F] tile (PyTorch semantics)."""
    x = x_ref[...].astype(jnp.float32)
    feat = x.shape[-1]

    mean = jnp.mean(x, axis=-1, keepdims=True)
    diff = x - mean
    # PyTorch x.std(-1): unbiased (Bessel-corrected) estimator.
    var = jnp.sum(diff * diff, axis=-1, keepdims=True) * (1.0 / (feat - 1))
    std = jnp.sqrt(var)
    inv = pl.reciprocal(std + jnp.float32(eps), approx=False)

    a = a_ref[...].astype(jnp.float32)
    b = b_ref[...].astype(jnp.float32)
    o_ref[...] = (diff * (a * inv) + b).astype(o_ref.dtype)


def _add_ln_kernel(r_ref, d_ref, a_ref, b_ref, s_ref, n_ref, *, eps):
    """Fused residual-add + LayerNorm on a [TILE_R, F] tile.

    s = r + d            (written to s_ref; needed for the following residual)
    n = LayerNorm(s)     (written to n_ref)
    """
    s = r_ref[...].astype(jnp.float32) + d_ref[...].astype(jnp.float32)
    s_ref[...] = s.astype(s_ref.dtype)

    feat = s.shape[-1]
    mean = jnp.mean(s, axis=-1, keepdims=True)
    diff = s - mean
    var = jnp.sum(diff * diff, axis=-1, keepdims=True) * (1.0 / (feat - 1))
    std = jnp.sqrt(var)
    inv = pl.reciprocal(std + jnp.float32(eps), approx=False)

    a = a_ref[...].astype(jnp.float32)
    b = b_ref[...].astype(jnp.float32)
    n_ref[...] = (diff * (a * inv) + b).astype(n_ref.dtype)


# ---------------------------------------------------------------------------
# Wrappers (tiling / padding / pallas_call plumbing)
# ---------------------------------------------------------------------------

# Total VMEM budget for the pipelined row-tile buffers.  Conservative enough to
# fit the smallest default scoped-VMEM limit on any generation (v5e: 16 MiB).
_VMEM_PIPELINE_BUDGET = 8 * 1024 * 1024


def _choose_tile_rows(rows, feat, itemsize, n_row_arrays):
    """Largest row-tile keeping all double-buffered row arrays under budget."""
    per_buffer = _VMEM_PIPELINE_BUDGET // (2 * n_row_arrays)
    tile = per_buffer // max(1, feat * itemsize)
    tile = max(8, min(1024, tile))
    tile = (tile // 8) * 8
    if rows <= tile:
        return rows  # single block == full array dim (always layout-legal)
    return tile


def _flatten_rows(x):
    feat = x.shape[-1]
    rows = 1
    for d in x.shape[:-1]:
        rows *= d
    return x.reshape(rows, feat), rows, feat


_COMPILER_PARAMS = pltpu.CompilerParams(
    dimension_semantics=("parallel",),
    vmem_limit_bytes=32 * 1024 * 1024,
)


def layernorm_pallas(x, a_2, b_2, eps=1e-6):
    """LayerNorm over the last dim of x (PyTorch unbiased-std semantics)."""
    orig_shape = x.shape
    x2, rows, feat = _flatten_rows(x)
    a2 = a_2.reshape(1, feat)
    b2 = b_2.reshape(1, feat)

    tile_r = _choose_tile_rows(rows, feat, x2.dtype.itemsize, n_row_arrays=2)
    padded = pl.cdiv(rows, tile_r) * tile_r
    if padded != rows:
        x2 = jnp.pad(x2, ((0, padded - rows), (0, 0)))

    row_spec = pl.BlockSpec((tile_r, feat), lambda i: (i, 0))
    par_spec = pl.BlockSpec((1, feat), lambda i: (0, 0))

    out = pl.pallas_call(
        functools.partial(_ln_kernel, eps=eps),
        out_shape=jax.ShapeDtypeStruct((padded, feat), x.dtype),
        grid_spec=pltpu.PrefetchScalarGridSpec(
            num_scalar_prefetch=0,
            grid=(padded // tile_r,),
            in_specs=[row_spec, par_spec, par_spec],
            out_specs=row_spec,
        ),
        compiler_params=_COMPILER_PARAMS,
    )(x2, a2, b2)

    if padded != rows:
        out = out[:rows]
    return out.reshape(orig_shape)


def add_layernorm_pallas(residual, delta, a_2, b_2, eps=1e-6):
    """Fused (residual + delta) and LayerNorm of the sum.

    Returns (sum, LayerNorm(sum)) with the same shape as `residual`.
    """
    orig_shape = residual.shape
    r2, rows, feat = _flatten_rows(residual)
    d2, _, _ = _flatten_rows(delta)
    a2 = a_2.reshape(1, feat)
    b2 = b_2.reshape(1, feat)

    tile_r = _choose_tile_rows(rows, feat, r2.dtype.itemsize, n_row_arrays=4)
    padded = pl.cdiv(rows, tile_r) * tile_r
    if padded != rows:
        pad = ((0, padded - rows), (0, 0))
        r2 = jnp.pad(r2, pad)
        d2 = jnp.pad(d2, pad)

    row_spec = pl.BlockSpec((tile_r, feat), lambda i: (i, 0))
    par_spec = pl.BlockSpec((1, feat), lambda i: (0, 0))

    s2, n2 = pl.pallas_call(
        functools.partial(_add_ln_kernel, eps=eps),
        out_shape=(
            jax.ShapeDtypeStruct((padded, feat), residual.dtype),
            jax.ShapeDtypeStruct((padded, feat), residual.dtype),
        ),
        grid_spec=pltpu.PrefetchScalarGridSpec(
            num_scalar_prefetch=0,
            grid=(padded // tile_r,),
            in_specs=[row_spec, row_spec, par_spec, par_spec],
            out_specs=[row_spec, row_spec],
        ),
        compiler_params=_COMPILER_PARAMS,
    )(r2, d2, a2, b2)

    if padded != rows:
        s2 = s2[:rows]
        n2 = n2[:rows]
    return s2.reshape(orig_shape), n2.reshape(orig_shape)


# ---------------------------------------------------------------------------
# EncoderLayer.forward
# ---------------------------------------------------------------------------

def encoder_layer_forward(x, mask, self_attn, feed_forward,
                          a_1, b_1, a_2, b_2, eps=1e-6):
    """EncoderLayer.forward (eval mode: dropout = identity).

    Note: the PyTorch forward passes `None` as the attention mask regardless
    of the `mask` argument; that behavior is reproduced here.
    """
    del mask  # forward() never forwards it to self_attn (it passes None)

    # norm_1(x) is called three times in the reference with identical result;
    # compute it once.
    n1 = layernorm_pallas(x, a_1, b_1, eps)

    # TODO(synk): self_attn / feed_forward are constructor-supplied callables
    # external to this module; applied as plain-JAX glue.  nn.Dropout is
    # treated as identity (inference mode), no in-kernel dropout implemented.
    attn_out = self_attn(n1, n1, n1, None)

    # Fused: x2 = x + attn_out ; n2 = norm_2(x2)   (one HBM pass)
    x2, n2 = add_layernorm_pallas(x, attn_out, a_2, b_2, eps)

    ff_out = feed_forward(n2)
    # Final residual add left to XLA (single elementwise op; a Pallas call
    # here would only add launch overhead).
    return x2 + ff_out


# ---------------------------------------------------------------------------
# Demo / self-test
# ---------------------------------------------------------------------------

if __name__ == "__main__":
    key = jax.random.PRNGKey(0)
    batch, seq, size, d_ff = 2, 8, 128, 256   # size=128 -> lane-dense stores
    eps = 1e-6

    kx, kw1, kw2 = jax.random.split(key, 3)
    x = jax.random.normal(kx, (batch, seq, size), dtype=jnp.float32)
    mask = jnp.ones((batch, 1, seq), dtype=jnp.float32)  # unused by forward()

    # LayerNorm parameters, initialized exactly as in the module's __init__.
    a_1 = jnp.ones((size,), jnp.float32)
    b_1 = jnp.zeros((size,), jnp.float32)
    a_2 = jnp.ones((size,), jnp.float32)
    b_2 = jnp.zeros((size,), jnp.float32)

    # Externally supplied sublayers (constructor args of EncoderLayer):
    # deterministic plain-JAX stand-ins.
    w1 = jax.random.normal(kw1, (size, d_ff), jnp.float32) * 0.05
    w2 = jax.random.normal(kw2, (d_ff, size), jnp.float32) * 0.05

    def demo_self_attn(q, k, v, m):
        scores = jnp.einsum("bqd,bkd->bqk", q, k) / jnp.sqrt(
            jnp.float32(q.shape[-1]))
        return jnp.einsum("bqk,bkd->bqd", jax.nn.softmax(scores, axis=-1), v)

    def demo_feed_forward(h):
        return jax.nn.relu(h @ w1) @ w2

    out = encoder_layer_forward(x, mask, demo_self_attn, demo_feed_forward,
                                a_1, b_1, a_2, b_2, eps=eps)
    out = jax.block_until_ready(out)

    # Pure-JAX reference of the PyTorch semantics (eval-mode dropout = id).
    def ref_ln(t, a, b):
        mean = jnp.mean(t, axis=-1, keepdims=True)
        diff = t - mean
        var = jnp.sum(diff * diff, axis=-1, keepdims=True) / (t.shape[-1] - 1)
        return a * diff / (jnp.sqrt(var) + eps) + b

    n1_ref = ref_ln(x, a_1, b_1)
    x2_ref = x + demo_self_attn(n1_ref, n1_ref, n1_ref, None)
    ref = x2_ref + demo_feed_forward(ref_ln(x2_ref, a_2, b_2))

    err = float(jnp.max(jnp.abs(out - ref)))
    assert jnp.allclose(out, ref, atol=1e-4, rtol=1e-4), err

    print("KERNEL_OK")
</pallas_src>

<mosaic_0001>
module attributes {stable_mosaic.version = 11 : i64} {
  func.func @_ln_kernel(%arg0: i32, %arg1: memref<16x128xf32, #tpu.memory_space<vmem>>, %arg2: memref<1x128xf32, #tpu.memory_space<vmem>>, %arg3: memref<1x128xf32, #tpu.memory_space<vmem>>, %arg4: memref<16x128xf32, #tpu.memory_space<vmem>>) attributes {dimension_semantics = [#tpu.dimension_semantics<parallel>], iteration_bounds = array<i64: 1>, scalar_prefetch = 0 : i64, scratch_operands = 0 : i64, tpu.core_type = #tpu.core_type<tc>, window_params = [{transform_indices = @transform_0, window_bounds = array<i64: 16, 128>}, {pipeline_mode = #tpu.pipeline_mode<synchronous>, transform_indices = @transform_1, window_bounds = array<i64: 1, 128>}, {pipeline_mode = #tpu.pipeline_mode<synchronous>, transform_indices = @transform_2, window_bounds = array<i64: 1, 128>}, {transform_indices = @transform_3, window_bounds = array<i64: 16, 128>}]} {
    %c0 = arith.constant 0 : index
    %c0_0 = arith.constant 0 : index
    %0 = vector.load %arg1[%c0, %c0_0] : memref<16x128xf32, #tpu.memory_space<vmem>>, vector<16x128xf32>
    %cst = arith.constant dense<0.000000e+00> : vector<16xf32>
    %1 = vector.multi_reduction <add>, %0, %cst [1] : vector<16x128xf32> to vector<16xf32>
    %2 = vector.shape_cast %1 : vector<16xf32> to vector<16x1xf32>
    %cst_1 = arith.constant 1.280000e+02 : f32
    %3 = vector.broadcast %cst_1 : f32 to vector<16x1xf32>
    %4 = arith.divf %2, %3 : vector<16x1xf32>
    %5 = vector.broadcast %4 : vector<16x1xf32> to vector<16x128xf32>
    %6 = arith.subf %0, %5 : vector<16x128xf32>
    %7 = arith.mulf %6, %6 : vector<16x128xf32>
    %cst_2 = arith.constant dense<0.000000e+00> : vector<16xf32>
    %8 = vector.multi_reduction <add>, %7, %cst_2 [1] : vector<16x128xf32> to vector<16xf32>
    %9 = vector.shape_cast %8 : vector<16xf32> to vector<16x1xf32>
    %cst_3 = arith.constant 0.00787401571 : f32
    %10 = vector.broadcast %cst_3 : f32 to vector<16x1xf32>
    %11 = arith.mulf %9, %10 : vector<16x1xf32>
    %12 = math.sqrt %11 : vector<16x1xf32>
    %cst_4 = arith.constant 9.99999997E-7 : f32
    %13 = vector.broadcast %cst_4 : f32 to vector<16x1xf32>
    %14 = arith.addf %12, %13 : vector<16x1xf32>
    %15 = tpu.reciprocal %14 : vector<16x1xf32> -> vector<16x1xf32>
    %c0_5 = arith.constant 0 : index
    %c0_6 = arith.constant 0 : index
    %16 = vector.load %arg2[%c0_5, %c0_6] : memref<1x128xf32, #tpu.memory_space<vmem>>, vector<1x128xf32>
    %c0_7 = arith.constant 0 : index
    %c0_8 = arith.constant 0 : index
    %17 = vector.load %arg3[%c0_7, %c0_8] : memref<1x128xf32, #tpu.memory_space<vmem>>, vector<1x128xf32>
    %18 = vector.broadcast %16 : vector<1x128xf32> to vector<16x128xf32>
    %19 = vector.broadcast %15 : vector<16x1xf32> to vector<16x128xf32>
    %20 = arith.mulf %18, %19 : vector<16x128xf32>
    %21 = arith.mulf %6, %20 : vector<16x128xf32>
    %22 = vector.broadcast %17 : vector<1x128xf32> to vector<16x128xf32>
    %23 = arith.addf %21, %22 : vector<16x128xf32>
    %c0_9 = arith.constant 0 : index
    %c0_10 = arith.constant 0 : index
    %24 = vector.load %arg4[%c0_9, %c0_10] : memref<16x128xf32, #tpu.memory_space<vmem>>, vector<16x128xf32>
    tpu.vector_store %arg4[%c0_9, %c0_10], %23 {strides = array<i32>} : memref<16x128xf32, #tpu.memory_space<vmem>>, vector<16x128xf32>,
    return
  }
  func.func @transform_0(%arg0: i32) -> (i32, i32) {
    %c0_i32 = arith.constant 0 : i32
    %c0_i32_0 = arith.constant 0 : i32
    return %arg0, %c0_i32 : i32, i32
  }
  func.func @transform_1(%arg0: i32) -> (i32, i32) {
    %c0_i32 = arith.constant 0 : i32
    %c0_i32_0 = arith.constant 0 : i32
    %c0_i32_1 = arith.constant 0 : i32
    return %c0_i32, %c0_i32_0 : i32, i32
  }
  func.func @transform_2(%arg0: i32) -> (i32, i32) {
    %c0_i32 = arith.constant 0 : i32
    %c0_i32_0 = arith.constant 0 : i32
    %c0_i32_1 = arith.constant 0 : i32
    return %c0_i32, %c0_i32_0 : i32, i32
  }
  func.func @transform_3(%arg0: i32) -> (i32, i32) {
    %c0_i32 = arith.constant 0 : i32
    %c0_i32_0 = arith.constant 0 : i32
    return %arg0, %c0_i32 : i32, i32
  }
}

</mosaic_0001>

<llo_original>
// kernel: tpu_custom_call.1
$region0: #{tpu_custom_call.1}
  #allocation0 [shape = 'u32[]', space=smem, size = 0x4, offset = 0x4, fixed_abs, tag = 'smem constant byte address 0x4 - core index']
  #allocation1 [shape = 'u32[72,128]{1,0:T(1,128)}', space=vmem, size = 0x9000, scoped, tag = 'internal scratch']
  %s0 = inlined_call_operand.hbm [shape: f32[16,128], index: 0, kind: input, shape index: {}]
  %s1 = inlined_call_operand.hbm [shape: f32[1,128], index: 1, kind: input, shape index: {}]
  %s2 = inlined_call_operand.vmem [shape: f32[1,128], index: 2, kind: input, shape index: {}]
  %s3 = inlined_call_operand.hbm [shape: f32[16,128], index: 3, kind: output, shape index: {}]
  %s4 = sld [smem:[#allocation0]]
  $region30: #{tpu_custom_call.1} parent=0
    _
  %s6 = ssub.s32 1, %s4
  %s7 = scalar_select 0, %s6, %s4
  $region1: #{tpu_custom_call.1} parent=0
    #allocation2 [shape = 'u8[8192]{0}', space=vmem, size = 0x2000, scoped, tag = 'input window, operand 0, single buffered']
    #allocation3 [shape = 's32[1]{0}', space=sflag, size = 0x4, scoped, tag = 'scoped memory for tpu_custom_call.1']
    #allocation4 [shape = 's32[1]{0}', space=sflag, size = 0x4, scoped, tag = 'scoped memory for tpu_custom_call.1']
    #allocation5 [shape = 'u8[512]{0}', space=vmem, size = 0x400, scoped, tag = 'input window, operand 1, single buffered']
    #allocation6 [shape = 's32[1]{0}', space=sflag, size = 0x4, scoped, tag = 'scoped memory for tpu_custom_call.1']
    #allocation7 [shape = 'u8[8192]{0}', space=vmem, size = 0x2000, scoped, tag = 'output window, operand 0, single buffered']
    %8 = vsyncpa [#allocation3], 0
    %9 = vsyncpa [#allocation6], 0
    %10 = vsyncpa [#allocation4], 0
    // Predicated region
    $region2: #{tpu_custom_call.1} parent=1 // pred_check
      _
    $region3: #{tpu_custom_call.1} parent=1 // pred_check_branch
      %12 = sbr.rel (0) target = $region5
    $region4: #{tpu_custom_call.1} parent=1 // pred_region
      %14 = vsyncadd [#allocation3], 0
      %s15 = sshll.u32 %s0, 4
      %s16 = int_to_ptr.hbm [resolvable:$true] %s15
      %s17 = sshll.u32 [#allocation2], 4
      %s18 = int_to_ptr.vmem [resolvable:$true] %s17
      %23 = dma.hbm_to_vmem [thread:$0]  %s16, 256, %s18, [#allocation3], 128, 128, 8
    $region5: #{tpu_custom_call.1} parent=1 // pred_fallthru
      _
    // Predicated region
    $region6: #{tpu_custom_call.1} parent=1 // pred_check
      _
    $region7: #{tpu_custom_call.1} parent=1 // pred_check_branch
      %25 = sbr.rel (0) target = $region9
    $region8: #{tpu_custom_call.1} parent=1 // pred_region
      %27 = vsyncadd [#allocation6], 0
      %s29 = sshll.u32 %s1, 4
      %s30 = int_to_ptr.hbm [resolvable:$true] %s29
      %s31 = sshll.u32 [#allocation5], 4
      %s32 = int_to_ptr.vmem [resolvable:$true] %s31
      %34 = dma.hbm_to_vmem [thread:$0]  %s30, 16, %s32, [#allocation6]
    $region9: #{tpu_custom_call.1} parent=1 // pred_fallthru
      _
    // Predicated region
    $region10: #{tpu_custom_call.1} parent=1 // pred_check
      _
    $region11: #{tpu_custom_call.1} parent=1 // pred_check_branch
      %36 = sbr.rel (0) target = $region13
    $region12: #{tpu_custom_call.1} parent=1 // pred_region
      _
    $region13: #{tpu_custom_call.1} parent=1 // pred_fallthru
      _
    // Predicated region
    $region14: #{tpu_custom_call.1} parent=1 // pred_check
      _
    $region15: #{tpu_custom_call.1} parent=1 // pred_check_branch
      %38 = sbr.rel (0) target = $region17
    $region16: #{tpu_custom_call.1} parent=1 // pred_region
      %40 = dma.done [#allocation3], 256
    $region17: #{tpu_custom_call.1} parent=1 // pred_fallthru
      _
    // Predicated region
    $region18: #{tpu_custom_call.1} parent=1 // pred_check
      _
    $region19: #{tpu_custom_call.1} parent=1 // pred_check_branch
      %42 = sbr.rel (0) target = $region21
    $region20: #{tpu_custom_call.1} parent=1 // pred_region
      %44 = dma.done [#allocation6], 16
    $region21: #{tpu_custom_call.1} parent=1 // pred_fallthru
      _
    %v45 = vld [vmem:[#allocation2] sm:$0xff]
    %v46 = vld [vmem:[#allocation2 + $0x8] sm:$0xff]
    %47 = vadd.xlane.f32.xlu0 %v45
    %v48 = vpop.xlane.xlu0 %47
    %49 = vadd.xlane.f32.xlu0 %v46
    %v50 = vpop.xlane.xlu0 %49
    %v51 = vrcp.pop 128.0
    %v52 = vmul.f32 128.0, %v51
    %v53 = vsub.f32 1.0, %v52
    %v54 = vmul.f32 %v51, %v53
    %v55 = vadd.f32 %v51, %v54
    %vm56 = vweird.f32 %v51
    %v57 = vsel %vm56, %v51, %v55
    %v58 = vmul.f32 %v48, %v57
    %v59 = vmul.f32 %v50, %v57
    %v60 = vsub.f32 %v45, %v58
    %v61 = vsub.f32 %v46, %v59
    %v62 = vmul.f32 %v60, %v60
    %v63 = vmul.f32 %v61, %v61
    %64 = vadd.xlane.f32.xlu0 %v62
    %v65 = vpop.xlane.xlu0 %64
    %66 = vadd.xlane.f32.xlu0 %v63
    %v67 = vpop.xlane.xlu0 %66
    %v68 = vmul.f32 %v65, 0.007874016
    %v69 = vmul.f32 %v67, 0.007874016
    %v70 = vrsqrt.pop %v68
    %v71 = vmul.f32 %v70, %v68
    %v72 = vmul.f32 %v71, %v70
    %v73 = vmul.f32 0.5, %v72
    %v74 = vsub.f32 1.5, %v73
    %v75 = vmul.f32 %v70, %v74
    %v76 = vmul.f32 %v68, %v75
    %vm77 = vcmp.eq.f32.partialorder %v68, inf
    %v78 = vsel %vm77, %v68, %v76
    %vm79 = vcmp.eq.f32.partialorder %v68, 0.0
    %v80 = vand.u32 %v68, 2147483648
    %v81 = vsel %vm79, %v80, %v78
    %v82 = vrsqrt.pop %v69
    %v83 = vmul.f32 %v82, %v69
    %v84 = vmul.f32 %v83, %v82
    %v85 = vmul.f32 0.5, %v84
    %v86 = vsub.f32 1.5, %v85
    %v87 = vmul.f32 %v82, %v86
    %v88 = vmul.f32 %v69, %v87
    %vm89 = vcmp.eq.f32.partialorder %v69, inf
    %v90 = vsel %vm89, %v69, %v88
    %vm91 = vcmp.eq.f32.partialorder %v69, 0.0
    %v92 = vand.u32 %v69, 2147483648
    %v93 = vsel %vm91, %v92, %v90
    %v94 = vadd.f32 %v81, 1e-06
    %v95 = vadd.f32 %v93, 1e-06
    %v96 = vrcp.pop %v94
    %v97 = vmul.f32 %v94, %v96
    %v98 = vsub.f32 1.0, %v97
    %v99 = vmul.f32 %v96, %v98
    %v100 = vadd.f32 %v96, %v99
    %vm101 = vweird.f32 %v94
    %vm102 = vweird.f32 %v96
    %vm103 = vmor %vm101, %vm102
    %v104 = vsel %vm103, %v96, %v100
    %v105 = vand.u32 2147483647, %v94
    %vm106 = vcmp.eq.f32.partialorder %v105, 8.507059e+37
    %v107 = vand.u32 %v94, 2147483648
    %v108 = vor.u32 1.1754944e-38, %v107
    %v109 = vsel %vm106, %v108, %v104
    %v110 = vrcp.pop %v95
    %v111 = vmul.f32 %v95, %v110
    %v112 = vsub.f32 1.0, %v111
    %v113 = vmul.f32 %v110, %v112
    %v114 = vadd.f32 %v110, %v113
    %vm115 = vweird.f32 %v95
    %vm116 = vweird.f32 %v110
    %vm117 = vmor %vm115, %vm116
    %v118 = vsel %vm117, %v110, %v114
    %v119 = vand.u32 2147483647, %v95
    %vm120 = vcmp.eq.f32.partialorder %v119, 8.507059e+37
    %v121 = vand.u32 %v95, 2147483648
    %v122 = vor.u32 1.1754944e-38, %v121
    %v123 = vsel %vm120, %v122, %v118
    %v124 = vld [vmem:[#allocation5] sm:$0x1]
    %v125 = vld [vmem:[%s2] sm:$0x1]
    %v127 = vperm.slane %v124, 0
    %v129 = vmul.f32 %v127, %v109
    %v130 = vmul.f32 %v127, %v123
    %v131 = vmul.f32 %v60, %v129
    %v132 = vmul.f32 %v61, %v130
    %v134 = vperm.slane %v125, 0
    %v136 = vadd.f32 %v131, %v134
    %v137 = vadd.f32 %v132, %v134
    %138 = vst [vmem:[#allocation7] sm:$0xff] %v136
    %139 = vst [vmem:[#allocation7 + $0x8] sm:$0xff] %v137
    // Predicated region
    $region22: #{tpu_custom_call.1} parent=1 // pred_check
      _
    $region23: #{tpu_custom_call.1} parent=1 // pred_check_branch
      %141 = sbr.rel (0) target = $region25
    $region24: #{tpu_custom_call.1} parent=1 // pred_region
      %143 = vsyncadd [#allocation4], 0
      %s144 = sshll.u32 [#allocation7], 4
      %s145 = int_to_ptr.vmem [resolvable:$true] %s144
      %s146 = sshll.u32 %s3, 4
      %s147 = int_to_ptr.hbm [resolvable:$true] %s146
      %152 = dma.vmem_to_hbm [thread:$0]  %s145, 256, %s147, [#allocation4], 128, 128, 8
    $region25: #{tpu_custom_call.1} parent=1 // pred_fallthru
      _
    // Predicated region
    $region26: #{tpu_custom_call.1} parent=1 // pred_check
      _
    $region27: #{tpu_custom_call.1} parent=1 // pred_check_branch
      %154 = sbr.rel (0) target = $region29
    $region28: #{tpu_custom_call.1} parent=1 // pred_region
      %156 = dma.done [#allocation4], 256
    $region29: #{tpu_custom_call.1} parent=1 // pred_fallthru
      _
    %157 = vsyncpa [#allocation3], 1
    %158 = vsyncpa [#allocation6], 1
    %159 = vsyncpa [#allocation4], 1

</llo_original>
